<compile_context>
chip_gen: v6e
topology: v6e:2x2x1
jax: 0.10.0
libtpu: 0.0.40
codegen_flags: <defaults>
</compile_context>

<pallas_src>
import jax
import jax.numpy as jnp
from jax.experimental import pallas as pl
from jax.experimental.pallas import tpu as pltpu


def disc_kernel(x_ref, w1_ref, b1_ref, w2_ref, b2_ref, w3_ref, b3_ref, o_ref, acc_ref):
    k = pl.program_id(1)

    @pl.when(k == 0)
    def _init():
        acc_ref[...] = jnp.zeros_like(acc_ref)

    # fc[0]: Linear(D -> 2F), accumulated over the K (feature) grid axis in f32.
    acc_ref[...] += jnp.dot(x_ref[...], w1_ref[...], preferred_element_type=jnp.float32)

    @pl.when(k == pl.num_programs(1) - 1)
    def _finish():
        # ReLU; fc[2] Dropout(p) is identity in eval mode.
        h1 = jnp.maximum(acc_ref[...] + b1_ref[...], 0.0)

        # fc[3]: Linear(2F -> F) + ReLU  (low-precision MXU inputs, f32 accumulation)
        h2 = jnp.dot(h1.astype(w2_ref.dtype), w2_ref[...],
                     preferred_element_type=jnp.float32)
        h2 = jnp.maximum(h2 + b2_ref[...], 0.0)

        # cls: Linear(F -> 2)  (N lane-padded to 128; extra columns are exact zeros)
        out = jnp.dot(h2.astype(w3_ref.dtype), w3_ref[...],
                      preferred_element_type=jnp.float32) + b3_ref[...]
        o_ref[...] = out.astype(o_ref.dtype)


def _round_up(a, m):
    return ((a + m - 1) // m) * m


def _sublane(dtype):
    # Native sublane packing: 8 rows for 4-byte, 16 for 2-byte, 32 for 1-byte dtypes.
    return max(8, 32 // jnp.dtype(dtype).itemsize)


def _vmem_capacity_bytes():
    cap = 64 << 20  # conservative default (v7x physical VMEM per TensorCore)
    try:
        info = pltpu.get_tpu_info()
        cap = int(getattr(info, "vmem_capacity_bytes", cap)) or cap
    except Exception:
        pass
    if _has_two_tensorcores():
        cap = min(cap, 64 << 20)  # v7x: 64 MiB per TC regardless of what info reports
    return cap


def _has_two_tensorcores():
    try:
        kind = jax.devices()[0].device_kind.lower()
    except Exception:
        return False
    return ("v7" in kind) or ("tpu7" in kind) or ("7x" in kind)


def _vmem_bytes(tb, tk, nk, H1p, H2p, Op, x_item, w_item, o_item):
    x_tiles = 2 * tb * tk * x_item                     # double-buffered x tile
    o_tiles = 2 * tb * Op * o_item                     # double-buffered out tile
    w1_tiles = (2 if nk > 1 else 1) * tk * H1p * w_item
    w_resident = H1p * H2p * w_item + H2p * Op * w_item + (H1p + H2p + Op) * 4
    acc = tb * H1p * 4                                 # f32 accumulator scratch
    return x_tiles + o_tiles + w1_tiles + w_resident + acc


def init_discriminator_params(key, input_dim, feature_dim=512):
    """Deterministic synthetic params. Weights stored as [in, out] (transposed vs PyTorch)."""
    k1, k2, k3, k4, k5, k6 = jax.random.split(key, 6)
    h1, h2, o = feature_dim * 2, feature_dim, 2
    scale = 0.02
    w1 = scale * jax.random.normal(k1, (input_dim, h1), jnp.float32)
    b1 = scale * jax.random.normal(k2, (1, h1), jnp.float32)
    w2 = scale * jax.random.normal(k3, (h1, h2), jnp.float32)
    b2 = scale * jax.random.normal(k4, (1, h2), jnp.float32)
    w3 = scale * jax.random.normal(k5, (h2, o), jnp.float32)
    b3 = scale * jax.random.normal(k6, (1, o), jnp.float32)
    return (w1, b1, w2, b2, w3, b3)


def prepare_discriminator_params(params, *, compute_dtype=jnp.bfloat16, tk_target=1024):
    """One-time padding / casting of weights (hoisted out of the forward path).

    compute_dtype: MXU-input dtype for x/W1/W2/W3 (bf16 recommended on all generations;
                   accumulation is always f32).  Biases stay f32.
    tk_target:     target K-tile over the flattened input dim D (multiple of 128).
    """
    w1, b1, w2, b2, w3, b3 = params
    D, H1 = w1.shape
    H2 = w2.shape[1]
    O = w3.shape[1]
    H1p = _round_up(H1, 128)
    H2p = _round_up(H2, 128)
    Op = _round_up(O, 128)

    tk_target = max(128, _round_up(tk_target, 128))
    if D <= tk_target:
        tk, Dp = D, D                       # single K block; no feature padding of x
    else:
        tk = None
        for cand in range(tk_target, 127, -128):   # prefer a 128-aligned divisor of D
            if D % cand == 0:
                tk = cand
                break
        if tk is None:
            tk = tk_target
        Dp = _round_up(D, tk)

    f32, cd = jnp.float32, compute_dtype
    # Zero padding is mathematically exact: padded weight rows/cols and biases are 0, ReLU(0)=0.
    w1p = jnp.zeros((Dp, H1p), cd).at[:D, :H1].set(w1.astype(cd))
    b1p = jnp.zeros((1, H1p), f32).at[:, :H1].set(jnp.reshape(b1, (1, H1)).astype(f32))
    w2p = jnp.zeros((H1p, H2p), cd).at[:H1, :H2].set(w2.astype(cd))
    b2p = jnp.zeros((1, H2p), f32).at[:, :H2].set(jnp.reshape(b2, (1, H2)).astype(f32))
    w3p = jnp.zeros((H2p, Op), cd).at[:H2, :O].set(w3.astype(cd))
    b3p = jnp.zeros((1, Op), f32).at[:, :O].set(jnp.reshape(b3, (1, O)).astype(f32))

    return {
        "weights": (w1p, b1p, w2p, b2p, w3p, b3p),
        "D": D, "Dp": Dp, "tk": tk,
        "H1p": H1p, "H2p": H2p, "Op": Op, "O": O,
        "compute_dtype": cd,
    }


def discriminator_forward(x, prepped, *, tb=None, out_dtype=jnp.bfloat16):
    """x: any shape [B, ...]; flattened to [B, D] like x.view(B, -1).

    prepped: output of prepare_discriminator_params (pre-padded weights).
    tb:      batch tile (None -> auto: 1024 on big-VMEM chips, 512 otherwise).
    out_dtype: dtype of the logits written back (bf16 halves the 128-lane writeback).
    """
    w1p, b1p, w2p, b2p, w3p, b3p = prepped["weights"]
    D, Dp, tk = prepped["D"], prepped["Dp"], prepped["tk"]
    H1p, H2p, Op, O = prepped["H1p"], prepped["H2p"], prepped["Op"], prepped["O"]
    cd = prepped["compute_dtype"]

    B = x.shape[0]
    xf = jnp.reshape(x, (B, -1))
    assert xf.shape[1] == D, f"input_dim mismatch: expected {D}, got {xf.shape[1]}"
    xk = xf.astype(cd)

    # Sublane alignment driven by the dtypes that share the batch dim.
    sub = max(_sublane(cd), _sublane(out_dtype))
    Bp = _round_up(B, sub)
    if Bp != B:
        xk = jnp.pad(xk, ((0, Bp - B), (0, 0)))          # small, only when misaligned
    if Dp != D:
        xk = jnp.pad(xk, ((0, 0), (0, Dp - D)))          # rare (non-128-divisible large D)

    nk = Dp // tk
    x_item = jnp.dtype(cd).itemsize
    o_item = jnp.dtype(out_dtype).itemsize

    cap = _vmem_capacity_bytes()
    budget = cap * 3 // 4                                 # ~96 MiB v5e/v6e, ~48 MiB v7x
    multicore = _has_two_tensorcores()

    if tb is None:
        tb = 1024 if budget >= (80 << 20) else 512

    tb_eff = max(sub, (min(tb, Bp) // sub) * sub)
    # v7x: ensure >=2 batch grid steps so the "parallel" axis can shard across both TCs.
    if multicore and Bp >= 2 * sub and pl.cdiv(Bp, tb_eff) < 2:
        tb_eff = max(sub, ((Bp // 2) // sub) * sub)
    # Real VMEM accounting: x/out double-buffered tiles + resident weights + accumulator.
    while tb_eff > sub and _vmem_bytes(tb_eff, tk, nk, H1p, H2p, Op,
                                       x_item, x_item, o_item) > budget:
        tb_eff = max(sub, ((tb_eff // 2) // sub) * sub)

    need = _vmem_bytes(tb_eff, tk, nk, H1p, H2p, Op, x_item, x_item, o_item)
    vmem_limit = int(min(cap, max(budget, need + (2 << 20))))

    nb = pl.cdiv(Bp, tb_eff)   # ragged final batch block handled by Pallas (OOB rows dropped)

    def call(single_buffer_weights):
        inv = {"pipeline_mode": pl.Buffered(1)} if single_buffer_weights else {}
        w1_mode = inv if nk == 1 else {}   # W1 is streamed over K when nk > 1
        grid_spec = pltpu.PrefetchScalarGridSpec(
            num_scalar_prefetch=0,
            grid=(nb, nk),
            in_specs=[
                pl.BlockSpec((tb_eff, tk), lambda i, k: (i, k)),            # x tile
                pl.BlockSpec((tk, H1p), lambda i, k: (k, 0), **w1_mode),    # W1 K-slab
                pl.BlockSpec((1, H1p), lambda i, k: (0, 0), **inv),         # b1
                pl.BlockSpec((H1p, H2p), lambda i, k: (0, 0), **inv),       # W2 (resident)
                pl.BlockSpec((1, H2p), lambda i, k: (0, 0), **inv),         # b2
                pl.BlockSpec((H2p, Op), lambda i, k: (0, 0), **inv),        # W3 (lane-padded)
                pl.BlockSpec((1, Op), lambda i, k: (0, 0), **inv),          # b3
            ],
            out_specs=pl.BlockSpec((tb_eff, Op), lambda i, k: (i, 0)),      # lane-dense out
            scratch_shapes=[pltpu.VMEM((tb_eff, H1p), jnp.float32)],        # fc1 accumulator
        )
        return pl.pallas_call(
            disc_kernel,
            out_shape=jax.ShapeDtypeStruct((Bp, Op), out_dtype),
            grid_spec=grid_spec,
            compiler_params=pltpu.CompilerParams(
                dimension_semantics=("parallel", "arbitrary"),
                vmem_limit_bytes=vmem_limit,
            ),
        )(xk, w1p, b1p, w2p, b2p, w3p, b3p)

    try:
        out = call(True)
    except Exception:
        # Fallback if this JAX build rejects pipeline_mode=pl.Buffered(1) on invariant inputs.
        out = call(False)

    return out[:B, :O]


if __name__ == "__main__":
    key = jax.random.PRNGKey(0)
    k_x, k_p, k_x2, k_p2, k_x3 = jax.random.split(key, 5)

    # Small shapes: x like a [B, C, H, W] feature map -> flattened input_dim = 4*4*4 = 64
    B, C, H, W = 2, 4, 4, 4
    input_dim = C * H * W
    feature_dim = 32

    x = jax.random.normal(k_x, (B, C, H, W), jnp.float32)
    params = init_discriminator_params(k_p, input_dim, feature_dim)

    def ref_forward(xv, prms):
        w1, b1, w2, b2, w3, b3 = prms
        xr = xv.reshape(xv.shape[0], -1)
        h = jnp.maximum(xr @ w1 + b1, 0.0)
        h = jnp.maximum(h @ w2 + b2, 0.0)
        return h @ w3 + b3

    ref = ref_forward(x, params)

    # 1) exact f32 path (single batch tile, single K block), strict tolerance
    prepped_f32 = prepare_discriminator_params(params, compute_dtype=jnp.float32)
    logits = discriminator_forward(x, prepped_f32, out_dtype=jnp.float32)
    jax.block_until_ready(logits)
    assert logits.shape == (B, 2), logits.shape
    assert jnp.allclose(logits, ref, atol=1e-5, rtol=1e-5), "f32 mismatch vs reference"

    # 2) multi-tile batch grid with a ragged final block (f32, exact)
    B2 = 24
    x2 = jax.random.normal(k_x2, (B2, C, H, W), jnp.float32)
    logits2 = discriminator_forward(x2, prepped_f32, tb=16, out_dtype=jnp.float32)
    jax.block_until_ready(logits2)
    ref2 = ref_forward(x2, params)
    assert logits2.shape == (B2, 2), logits2.shape
    assert jnp.allclose(logits2, ref2, atol=1e-5, rtol=1e-5), "ragged-grid mismatch vs reference"

    # 3) default fast path: bf16 MXU inputs on all three matmuls + bf16 output writeback
    prepped_bf16 = prepare_discriminator_params(params)            # compute_dtype=bf16
    logits_bf16 = discriminator_forward(x, prepped_bf16)           # out_dtype=bf16
    jax.block_until_ready(logits_bf16)
    assert logits_bf16.shape == (B, 2), logits_bf16.shape
    assert jnp.allclose(logits_bf16.astype(jnp.float32), ref, atol=2e-2, rtol=2e-2), \
        "bf16 mismatch vs reference"

    # 4) K-tiled path (grid over the flattened feature dim with f32 accumulator scratch)
    D3 = 256
    params3 = init_discriminator_params(k_p2, D3, feature_dim)
    x3 = jax.random.normal(k_x3, (16, D3), jnp.float32)
    prepped_kt = prepare_discriminator_params(params3, compute_dtype=jnp.float32, tk_target=128)
    logits3 = discriminator_forward(x3, prepped_kt, tb=8, out_dtype=jnp.float32)
    jax.block_until_ready(logits3)
    ref3 = ref_forward(x3, params3)
    assert logits3.shape == (16, 2), logits3.shape
    assert jnp.allclose(logits3, ref3, atol=1e-4, rtol=1e-4), "K-tiled mismatch vs reference"

    print("KERNEL_OK")
</pallas_src>

<mosaic_0001>
module attributes {stable_mosaic.version = 11 : i64} {
  func.func @disc_kernel(%arg0: i32, %arg1: i32, %arg2: memref<8x64xf32, #tpu.memory_space<vmem>>, %arg3: memref<64x128xf32, #tpu.memory_space<vmem>>, %arg4: memref<1x128xf32, #tpu.memory_space<vmem>>, %arg5: memref<128x128xf32, #tpu.memory_space<vmem>>, %arg6: memref<1x128xf32, #tpu.memory_space<vmem>>, %arg7: memref<128x128xf32, #tpu.memory_space<vmem>>, %arg8: memref<1x128xf32, #tpu.memory_space<vmem>>, %arg9: memref<8x128xf32, #tpu.memory_space<vmem>>, %arg10: memref<8x128xf32, #tpu.memory_space<vmem>>) attributes {dimension_semantics = [#tpu.dimension_semantics<parallel>, #tpu.dimension_semantics<arbitrary>], iteration_bounds = array<i64: 1, 1>, scalar_prefetch = 0 : i64, scratch_operands = 1 : i64, tpu.core_type = #tpu.core_type<tc>, window_params = [{transform_indices = @transform_0, window_bounds = array<i64: 8, 64>}, {pipeline_mode = #tpu.pipeline_mode<synchronous>, transform_indices = @transform_1, window_bounds = array<i64: 64, 128>}, {pipeline_mode = #tpu.pipeline_mode<synchronous>, transform_indices = @transform_2, window_bounds = array<i64: 1, 128>}, {pipeline_mode = #tpu.pipeline_mode<synchronous>, transform_indices = @transform_3, window_bounds = array<i64: 128, 128>}, {pipeline_mode = #tpu.pipeline_mode<synchronous>, transform_indices = @transform_4, window_bounds = array<i64: 1, 128>}, {pipeline_mode = #tpu.pipeline_mode<synchronous>, transform_indices = @transform_5, window_bounds = array<i64: 128, 128>}, {pipeline_mode = #tpu.pipeline_mode<synchronous>, transform_indices = @transform_6, window_bounds = array<i64: 1, 128>}, {transform_indices = @transform_7, window_bounds = array<i64: 8, 128>}]} {
    %c0_i32 = arith.constant 0 : i32
    %0 = arith.cmpi eq, %arg1, %c0_i32 : i32
    %1 = arith.extui %0 : i1 to i32
    %c0_i32_0 = arith.constant 0 : i32
    %2 = arith.cmpi ne, %1, %c0_i32_0 : i32
    scf.if %2 {
      %cst_10 = arith.constant 0.000000e+00 : f32
      %12 = vector.broadcast %cst_10 : f32 to vector<8x128xf32>
      %c0_11 = arith.constant 0 : index
      %c0_12 = arith.constant 0 : index
      %13 = vector.load %arg10[%c0_11, %c0_12] : memref<8x128xf32, #tpu.memory_space<vmem>>, vector<8x128xf32>
      tpu.vector_store %arg10[%c0_11, %c0_12], %12 {strides = array<i32>} : memref<8x128xf32, #tpu.memory_space<vmem>>, vector<8x128xf32>,
    } else {
    }
    %c0 = arith.constant 0 : index
    %c0_1 = arith.constant 0 : index
    %3 = vector.load %arg10[%c0, %c0_1] : memref<8x128xf32, #tpu.memory_space<vmem>>, vector<8x128xf32>
    %c0_2 = arith.constant 0 : index
    %c0_3 = arith.constant 0 : index
    %4 = vector.load %arg2[%c0_2, %c0_3] : memref<8x64xf32, #tpu.memory_space<vmem>>, vector<8x64xf32>
    %c0_4 = arith.constant 0 : index
    %c0_5 = arith.constant 0 : index
    %5 = vector.load %arg3[%c0_4, %c0_5] : memref<64x128xf32, #tpu.memory_space<vmem>>, vector<64x128xf32>
    %cst = arith.constant dense<0.000000e+00> : vector<8x128xf32>
    %6 = tpu.matmul %4, %5, %cst {dimension_numbers = #tpu.dot_dimension_numbers<[1], [0], [0], [1], [0, 0, 1, 1], [], []>} : vector<8x64xf32>, vector<64x128xf32>, vector<8x128xf32> -> vector<8x128xf32>
    %7 = arith.addf %3, %6 : vector<8x128xf32>
    %c0_6 = arith.constant 0 : index
    %c0_7 = arith.constant 0 : index
    %8 = vector.load %arg10[%c0_6, %c0_7] : memref<8x128xf32, #tpu.memory_space<vmem>>, vector<8x128xf32>
    tpu.vector_store %arg10[%c0_6, %c0_7], %7 {strides = array<i32>} : memref<8x128xf32, #tpu.memory_space<vmem>>, vector<8x128xf32>,
    %c0_i32_8 = arith.constant 0 : i32
    %9 = arith.cmpi eq, %arg1, %c0_i32_8 : i32
    %10 = arith.extui %9 : i1 to i32
    %c0_i32_9 = arith.constant 0 : i32
    %11 = arith.cmpi ne, %10, %c0_i32_9 : i32
    scf.if %11 {
      %c0_10 = arith.constant 0 : index
      %c0_11 = arith.constant 0 : index
      %12 = vector.load %arg10[%c0_10, %c0_11] : memref<8x128xf32, #tpu.memory_space<vmem>>, vector<8x128xf32>
      %c0_12 = arith.constant 0 : index
      %c0_13 = arith.constant 0 : index
      %13 = vector.load %arg4[%c0_12, %c0_13] : memref<1x128xf32, #tpu.memory_space<vmem>>, vector<1x128xf32>
      %14 = vector.broadcast %13 : vector<1x128xf32> to vector<8x128xf32>
      %15 = arith.addf %12, %14 : vector<8x128xf32>
      %cst_14 = arith.constant 0.000000e+00 : f32
      %16 = vector.broadcast %cst_14 : f32 to vector<8x128xf32>
      %17 = arith.maximumf %15, %16 : vector<8x128xf32>
      %c0_15 = arith.constant 0 : index
      %c0_16 = arith.constant 0 : index
      %18 = vector.load %arg5[%c0_15, %c0_16] : memref<128x128xf32, #tpu.memory_space<vmem>>, vector<128x128xf32>
      %cst_17 = arith.constant dense<0.000000e+00> : vector<8x128xf32>
      %19 = tpu.matmul %17, %18, %cst_17 {dimension_numbers = #tpu.dot_dimension_numbers<[1], [0], [0], [1], [0, 0, 1, 1], [], []>} : vector<8x128xf32>, vector<128x128xf32>, vector<8x128xf32> -> vector<8x128xf32>
      %c0_18 = arith.constant 0 : index
      %c0_19 = arith.constant 0 : index
      %20 = vector.load %arg6[%c0_18, %c0_19] : memref<1x128xf32, #tpu.memory_space<vmem>>, vector<1x128xf32>
      %21 = vector.broadcast %20 : vector<1x128xf32> to vector<8x128xf32>
      %22 = arith.addf %19, %21 : vector<8x128xf32>
      %cst_20 = arith.constant 0.000000e+00 : f32
      %23 = vector.broadcast %cst_20 : f32 to vector<8x128xf32>
      %24 = arith.maximumf %22, %23 : vector<8x128xf32>
      %c0_21 = arith.constant 0 : index
      %c0_22 = arith.constant 0 : index
      %25 = vector.load %arg7[%c0_21, %c0_22] : memref<128x128xf32, #tpu.memory_space<vmem>>, vector<128x128xf32>
      %cst_23 = arith.constant dense<0.000000e+00> : vector<8x128xf32>
      %26 = tpu.matmul %24, %25, %cst_23 {dimension_numbers = #tpu.dot_dimension_numbers<[1], [0], [0], [1], [0, 0, 1, 1], [], []>} : vector<8x128xf32>, vector<128x128xf32>, vector<8x128xf32> -> vector<8x128xf32>
      %c0_24 = arith.constant 0 : index
      %c0_25 = arith.constant 0 : index
      %27 = vector.load %arg8[%c0_24, %c0_25] : memref<1x128xf32, #tpu.memory_space<vmem>>, vector<1x128xf32>
      %28 = vector.broadcast %27 : vector<1x128xf32> to vector<8x128xf32>
      %29 = arith.addf %26, %28 : vector<8x128xf32>
      %c0_26 = arith.constant 0 : index
      %c0_27 = arith.constant 0 : index
      %30 = vector.load %arg9[%c0_26, %c0_27] : memref<8x128xf32, #tpu.memory_space<vmem>>, vector<8x128xf32>
      tpu.vector_store %arg9[%c0_26, %c0_27], %29 {strides = array<i32>} : memref<8x128xf32, #tpu.memory_space<vmem>>, vector<8x128xf32>,
    } else {
    }
    return
  }
  func.func @transform_0(%arg0: i32, %arg1: i32) -> (i32, i32) {
    %c0_i32 = arith.constant 0 : i32
    return %arg0, %arg1 : i32, i32
  }
  func.func @transform_1(%arg0: i32, %arg1: i32) -> (i32, i32) {
    %c0_i32 = arith.constant 0 : i32
    %c0_i32_0 = arith.constant 0 : i32
    return %arg1, %c0_i32 : i32, i32
  }
  func.func @transform_2(%arg0: i32, %arg1: i32) -> (i32, i32) {
    %c0_i32 = arith.constant 0 : i32
    %c0_i32_0 = arith.constant 0 : i32
    %c0_i32_1 = arith.constant 0 : i32
    return %c0_i32, %c0_i32_0 : i32, i32
  }
  func.func @transform_3(%arg0: i32, %arg1: i32) -> (i32, i32) {
    %c0_i32 = arith.constant 0 : i32
    %c0_i32_0 = arith.constant 0 : i32
    %c0_i32_1 = arith.constant 0 : i32
    return %c0_i32, %c0_i32_0 : i32, i32
  }
  func.func @transform_4(%arg0: i32, %arg1: i32) -> (i32, i32) {
    %c0_i32 = arith.constant 0 : i32
    %c0_i32_0 = arith.constant 0 : i32
    %c0_i32_1 = arith.constant 0 : i32
    return %c0_i32, %c0_i32_0 : i32, i32
  }
  func.func @transform_5(%arg0: i32, %arg1: i32) -> (i32, i32) {
    %c0_i32 = arith.constant 0 : i32
    %c0_i32_0 = arith.constant 0 : i32
    %c0_i32_1 = arith.constant 0 : i32
    return %c0_i32, %c0_i32_0 : i32, i32
  }
  func.func @transform_6(%arg0: i32, %arg1: i32) -> (i32, i32) {
    %c0_i32 = arith.constant 0 : i32
    %c0_i32_0 = arith.constant 0 : i32
    %c0_i32_1 = arith.constant 0 : i32
    return %c0_i32, %c0_i32_0 : i32, i32
  }
  func.func @transform_7(%arg0: i32, %arg1: i32) -> (i32, i32) {
    %c0_i32 = arith.constant 0 : i32
    %c0_i32_0 = arith.constant 0 : i32
    return %arg0, %c0_i32 : i32, i32
  }
}

module attributes {stable_mosaic.version = 11 : i64} {
  func.func @disc_kernel(%arg0: i32, %arg1: i32, %arg2: memref<8x64xf32, #tpu.memory_space<vmem>>, %arg3: memref<64x128xf32, #tpu.memory_space<vmem>>, %arg4: memref<1x128xf32, #tpu.memory_space<vmem>>, %arg5: memref<128x128xf32, #tpu.memory_space<vmem>>, %arg6: memref<1x128xf32, #tpu.memory_space<vmem>>, %arg7: memref<128x128xf32, #tpu.memory_space<vmem>>, %arg8: memref<1x128xf32, #tpu.memory_space<vmem>>, %arg9: memref<8x128xf32, #tpu.memory_space<vmem>>, %arg10: memref<8x128xf32, #tpu.memory_space<vmem>>) attributes {dimension_semantics = [#tpu.dimension_semantics<parallel>, #tpu.dimension_semantics<arbitrary>], iteration_bounds = array<i64: 1, 1>, scalar_prefetch = 0 : i64, scratch_operands = 1 : i64, tpu.core_type = #tpu.core_type<tc>, window_params = [{transform_indices = @transform_0, window_bounds = array<i64: 8, 64>}, {transform_indices = @transform_1, window_bounds = array<i64: 64, 128>}, {pipeline_mode = #tpu.pipeline_mode<synchronous>, transform_indices = @transform_2, window_bounds = array<i64: 1, 128>}, {pipeline_mode = #tpu.pipeline_mode<synchronous>, transform_indices = @transform_3, window_bounds = array<i64: 128, 128>}, {pipeline_mode = #tpu.pipeline_mode<synchronous>, transform_indices = @transform_4, window_bounds = array<i64: 1, 128>}, {pipeline_mode = #tpu.pipeline_mode<synchronous>, transform_indices = @transform_5, window_bounds = array<i64: 128, 128>}, {pipeline_mode = #tpu.pipeline_mode<synchronous>, transform_indices = @transform_6, window_bounds = array<i64: 1, 128>}, {transform_indices = @transform_7, window_bounds = array<i64: 8, 128>}]} {
    %c0_i32 = arith.constant 0 : i32
    %0 = arith.cmpi eq, %arg1, %c0_i32 : i32
    %1 = arith.extui %0 : i1 to i32
    %c0_i32_0 = arith.constant 0 : i32
    %2 = arith.cmpi ne, %1, %c0_i32_0 : i32
    scf.if %2 {
      %cst_10 = arith.constant 0.000000e+00 : f32
      %12 = vector.broadcast %cst_10 : f32 to vector<8x128xf32>
      %c0_11 = arith.constant 0 : index
      %c0_12 = arith.constant 0 : index
      %13 = vector.load %arg10[%c0_11, %c0_12] : memref<8x128xf32, #tpu.memory_space<vmem>>, vector<8x128xf32>
      tpu.vector_store %arg10[%c0_11, %c0_12], %12 {strides = array<i32>} : memref<8x128xf32, #tpu.memory_space<vmem>>, vector<8x128xf32>,
    } else {
    }
    %c0 = arith.constant 0 : index
    %c0_1 = arith.constant 0 : index
    %3 = vector.load %arg10[%c0, %c0_1] : memref<8x128xf32, #tpu.memory_space<vmem>>, vector<8x128xf32>
    %c0_2 = arith.constant 0 : index
    %c0_3 = arith.constant 0 : index
    %4 = vector.load %arg2[%c0_2, %c0_3] : memref<8x64xf32, #tpu.memory_space<vmem>>, vector<8x64xf32>
    %c0_4 = arith.constant 0 : index
    %c0_5 = arith.constant 0 : index
    %5 = vector.load %arg3[%c0_4, %c0_5] : memref<64x128xf32, #tpu.memory_space<vmem>>, vector<64x128xf32>
    %cst = arith.constant dense<0.000000e+00> : vector<8x128xf32>
    %6 = tpu.matmul %4, %5, %cst {dimension_numbers = #tpu.dot_dimension_numbers<[1], [0], [0], [1], [0, 0, 1, 1], [], []>} : vector<8x64xf32>, vector<64x128xf32>, vector<8x128xf32> -> vector<8x128xf32>
    %7 = arith.addf %3, %6 : vector<8x128xf32>
    %c0_6 = arith.constant 0 : index
    %c0_7 = arith.constant 0 : index
    %8 = vector.load %arg10[%c0_6, %c0_7] : memref<8x128xf32, #tpu.memory_space<vmem>>, vector<8x128xf32>
    tpu.vector_store %arg10[%c0_6, %c0_7], %7 {strides = array<i32>} : memref<8x128xf32, #tpu.memory_space<vmem>>, vector<8x128xf32>,
    %c0_i32_8 = arith.constant 0 : i32
    %9 = arith.cmpi eq, %arg1, %c0_i32_8 : i32
    %10 = arith.extui %9 : i1 to i32
    %c0_i32_9 = arith.constant 0 : i32
    %11 = arith.cmpi ne, %10, %c0_i32_9 : i32
    scf.if %11 {
      %c0_10 = arith.constant 0 : index
      %c0_11 = arith.constant 0 : index
      %12 = vector.load %arg10[%c0_10, %c0_11] : memref<8x128xf32, #tpu.memory_space<vmem>>, vector<8x128xf32>
      %c0_12 = arith.constant 0 : index
      %c0_13 = arith.constant 0 : index
      %13 = vector.load %arg4[%c0_12, %c0_13] : memref<1x128xf32, #tpu.memory_space<vmem>>, vector<1x128xf32>
      %14 = vector.broadcast %13 : vector<1x128xf32> to vector<8x128xf32>
      %15 = arith.addf %12, %14 : vector<8x128xf32>
      %cst_14 = arith.constant 0.000000e+00 : f32
      %16 = vector.broadcast %cst_14 : f32 to vector<8x128xf32>
      %17 = arith.maximumf %15, %16 : vector<8x128xf32>
      %c0_15 = arith.constant 0 : index
      %c0_16 = arith.constant 0 : index
      %18 = vector.load %arg5[%c0_15, %c0_16] : memref<128x128xf32, #tpu.memory_space<vmem>>, vector<128x128xf32>
      %cst_17 = arith.constant dense<0.000000e+00> : vector<8x128xf32>
      %19 = tpu.matmul %17, %18, %cst_17 {dimension_numbers = #tpu.dot_dimension_numbers<[1], [0], [0], [1], [0, 0, 1, 1], [], []>} : vector<8x128xf32>, vector<128x128xf32>, vector<8x128xf32> -> vector<8x128xf32>
      %c0_18 = arith.constant 0 : index
      %c0_19 = arith.constant 0 : index
      %20 = vector.load %arg6[%c0_18, %c0_19] : memref<1x128xf32, #tpu.memory_space<vmem>>, vector<1x128xf32>
      %21 = vector.broadcast %20 : vector<1x128xf32> to vector<8x128xf32>
      %22 = arith.addf %19, %21 : vector<8x128xf32>
      %cst_20 = arith.constant 0.000000e+00 : f32
      %23 = vector.broadcast %cst_20 : f32 to vector<8x128xf32>
      %24 = arith.maximumf %22, %23 : vector<8x128xf32>
      %c0_21 = arith.constant 0 : index
      %c0_22 = arith.constant 0 : index
      %25 = vector.load %arg7[%c0_21, %c0_22] : memref<128x128xf32, #tpu.memory_space<vmem>>, vector<128x128xf32>
      %cst_23 = arith.constant dense<0.000000e+00> : vector<8x128xf32>
      %26 = tpu.matmul %24, %25, %cst_23 {dimension_numbers = #tpu.dot_dimension_numbers<[1], [0], [0], [1], [0, 0, 1, 1], [], []>} : vector<8x128xf32>, vector<128x128xf32>, vector<8x128xf32> -> vector<8x128xf32>
      %c0_24 = arith.constant 0 : index
      %c0_25 = arith.constant 0 : index
      %27 = vector.load %arg8[%c0_24, %c0_25] : memref<1x128xf32, #tpu.memory_space<vmem>>, vector<1x128xf32>
      %28 = vector.broadcast %27 : vector<1x128xf32> to vector<8x128xf32>
      %29 = arith.addf %26, %28 : vector<8x128xf32>
      %c0_26 = arith.constant 0 : index
      %c0_27 = arith.constant 0 : index
      %30 = vector.load %arg9[%c0_26, %c0_27] : memref<8x128xf32, #tpu.memory_space<vmem>>, vector<8x128xf32>
      tpu.vector_store %arg9[%c0_26, %c0_27], %29 {strides = array<i32>} : memref<8x128xf32, #tpu.memory_space<vmem>>, vector<8x128xf32>,
    } else {
    }
    return
  }
  func.func @transform_0(%arg0: i32, %arg1: i32) -> (i32, i32) {
    %c0_i32 = arith.constant 0 : i32
    return %arg0, %arg1 : i32, i32
  }
  func.func @transform_1(%arg0: i32, %arg1: i32) -> (i32, i32) {
    %c0_i32 = arith.constant 0 : i32
    %c0_i32_0 = arith.constant 0 : i32
    return %arg1, %c0_i32 : i32, i32
  }
  func.func @transform_2(%arg0: i32, %arg1: i32) -> (i32, i32) {
    %c0_i32 = arith.constant 0 : i32
    %c0_i32_0 = arith.constant 0 : i32
    %c0_i32_1 = arith.constant 0 : i32
    return %c0_i32, %c0_i32_0 : i32, i32
  }
  func.func @transform_3(%arg0: i32, %arg1: i32) -> (i32, i32) {
    %c0_i32 = arith.constant 0 : i32
    %c0_i32_0 = arith.constant 0 : i32
    %c0_i32_1 = arith.constant 0 : i32
    return %c0_i32, %c0_i32_0 : i32, i32
  }
  func.func @transform_4(%arg0: i32, %arg1: i32) -> (i32, i32) {
    %c0_i32 = arith.constant 0 : i32
    %c0_i32_0 = arith.constant 0 : i32
    %c0_i32_1 = arith.constant 0 : i32
    return %c0_i32, %c0_i32_0 : i32, i32
  }
  func.func @transform_5(%arg0: i32, %arg1: i32) -> (i32, i32) {
    %c0_i32 = arith.constant 0 : i32
    %c0_i32_0 = arith.constant 0 : i32
    %c0_i32_1 = arith.constant 0 : i32
    return %c0_i32, %c0_i32_0 : i32, i32
  }
  func.func @transform_6(%arg0: i32, %arg1: i32) -> (i32, i32) {
    %c0_i32 = arith.constant 0 : i32
    %c0_i32_0 = arith.constant 0 : i32
    %c0_i32_1 = arith.constant 0 : i32
    return %c0_i32, %c0_i32_0 : i32, i32
  }
  func.func @transform_7(%arg0: i32, %arg1: i32) -> (i32, i32) {
    %c0_i32 = arith.constant 0 : i32
    %c0_i32_0 = arith.constant 0 : i32
    return %arg0, %c0_i32 : i32, i32
  }
}

</mosaic_0001>

<llo_original>
// kernel: tpu_custom_call.1
$region0: #{tpu_custom_call.1}
  #allocation0 [shape = 'u32[]', space=smem, size = 0x4, offset = 0x4, fixed_abs, tag = 'smem constant byte address 0x4 - core index']
  #allocation1 [shape = 'u32[144,128]{1,0:T(1,128)}', space=vmem, size = 0x12000, scoped, tag = 'internal scratch']
  #allocation2 [shape = 'f32[8,128]{1,0:T(8,128)}', space=vmem, size = 0x1000, scoped, tag = 'scratch operand']
  %s0 = inlined_call_operand.hbm [shape: f32[8,64], index: 0, kind: input, shape index: {}]
  %s1 = inlined_call_operand.hbm [shape: f32[64,128], index: 1, kind: input, shape index: {}]
  %s2 = inlined_call_operand.vmem [shape: f32[1,128], index: 2, kind: input, shape index: {}]
  %s3 = inlined_call_operand.hbm [shape: f32[128,128], index: 3, kind: input, shape index: {}]
  %s4 = inlined_call_operand.vmem [shape: f32[1,128], index: 4, kind: input, shape index: {}]
  %s5 = inlined_call_operand.hbm [shape: f32[128,128], index: 5, kind: input, shape index: {}]
  %s6 = inlined_call_operand.vmem [shape: f32[1,128], index: 6, kind: input, shape index: {}]
  %s7 = inlined_call_operand.hbm [shape: f32[8,128], index: 7, kind: output, shape index: {}]
  %s8 = sld [smem:[#allocation0]]
  $region62: #{tpu_custom_call.1} parent=0
    _
  %s10 = ssub.s32 1, %s8
  %s11 = scalar_select 0, %s10, %s8
  $region1: #{tpu_custom_call.1} parent=0
    #allocation3 [shape = 'u8[4096]{0}', space=vmem, size = 0x1000, scoped, tag = 'input window, operand 0, single buffered']
    #allocation4 [shape = 's32[1]{0}', space=sflag, size = 0x4, scoped, tag = 'scoped memory for tpu_custom_call.1']
    #allocation5 [shape = 's32[1]{0}', space=sflag, size = 0x4, scoped, tag = 'scoped memory for tpu_custom_call.1']
    #allocation6 [shape = 'u8[32768]{0}', space=vmem, size = 0x8000, scoped, tag = 'input window, operand 1, single buffered']
    #allocation7 [shape = 's32[1]{0}', space=sflag, size = 0x4, scoped, tag = 'scoped memory for tpu_custom_call.1']
    #allocation8 [shape = 'u8[65536]{0}', space=vmem, size = 0x10000, scoped, tag = 'input window, operand 3, single buffered']
    #allocation9 [shape = 'u8[65536]{0}', space=vmem, size = 0x10000, scoped, tag = 'input window, operand 5, single buffered']
    #allocation10 [shape = 's32[1]{0}', space=sflag, size = 0x4, scoped, tag = 'scoped memory for tpu_custom_call.1']
    #allocation11 [shape = 'u8[4096]{0}', space=vmem, size = 0x1000, scoped, tag = 'output window, operand 0, single buffered']
    %12 = vsyncpa [#allocation4], 0
    %13 = vsyncpa [#allocation7], 0
    %14 = vsyncpa [#allocation10], 0
    %15 = vsyncpa [#allocation5], 0
    // Predicated region
    $region2: #{tpu_custom_call.1} parent=1 // pred_check
      _
    $region3: #{tpu_custom_call.1} parent=1 // pred_check_branch
      %17 = sbr.rel (0) target = $region5
    $region4: #{tpu_custom_call.1} parent=1 // pred_region
      %s19 = ssub.s32 128, 128
      %20 = vsyncadd [#allocation4], %s19
      %s22 = sshll.u32 [#allocation3], 4
      %s23 = int_to_ptr.vmem [resolvable:$true] %s22
      %25 = dma.hbm_to_vmem [thread:$0]  %s0, 128, %s23, [#allocation4]
    $region5: #{tpu_custom_call.1} parent=1 // pred_fallthru
      _
    // Predicated region
    $region6: #{tpu_custom_call.1} parent=1 // pred_check
      _
    $region7: #{tpu_custom_call.1} parent=1 // pred_check_branch
      %27 = sbr.rel (0) target = $region9
    $region8: #{tpu_custom_call.1} parent=1 // pred_region
      %s29 = ssub.s32 1024, 1024
      %30 = vsyncadd [#allocation7], %s29
      %s31 = sshll.u32 [#allocation6], 4
      %s32 = int_to_ptr.vmem [resolvable:$true] %s31
      %37 = dma.hbm_to_vmem [thread:$0]  %s1, 1024, %s32, [#allocation7], 128, 128, 8
    $region9: #{tpu_custom_call.1} parent=1 // pred_fallthru
      _
    // Predicated region
    $region10: #{tpu_custom_call.1} parent=1 // pred_check
      _
    $region11: #{tpu_custom_call.1} parent=1 // pred_check_branch
      %39 = sbr.rel (0) target = $region13
    $region12: #{tpu_custom_call.1} parent=1 // pred_region
      _
    $region13: #{tpu_custom_call.1} parent=1 // pred_fallthru
      _
    // Predicated region
    $region14: #{tpu_custom_call.1} parent=1 // pred_check
      _
    $region15: #{tpu_custom_call.1} parent=1 // pred_check_branch
      %41 = sbr.rel (0) target = $region17
    $region16: #{tpu_custom_call.1} parent=1 // pred_region
      %s43 = ssub.s32 2048, 2048
      %44 = vsyncadd [#allocation7], %s43
      %s45 = sshll.u32 [#allocation8], 4
      %s46 = int_to_ptr.vmem [resolvable:$true] %s45
      %51 = dma.hbm_to_vmem [thread:$0]  %s3, 2048, %s46, [#allocation7], 128, 128, 8
    $region17: #{tpu_custom_call.1} parent=1 // pred_fallthru
      _
    // Predicated region
    $region18: #{tpu_custom_call.1} parent=1 // pred_check
      _
    $region19: #{tpu_custom_call.1} parent=1 // pred_check_branch
      %53 = sbr.rel (0) target = $region21
    $region20: #{tpu_custom_call.1} parent=1 // pred_region
      _
    $region21: #{tpu_custom_call.1} parent=1 // pred_fallthru
      _
    // Predicated region
    $region22: #{tpu_custom_call.1} parent=1 // pred_check
      _
    $region23: #{tpu_custom_call.1} parent=1 // pred_check_branch
      %55 = sbr.rel (0) target = $region25
    $region24: #{tpu_custom_call.1} parent=1 // pred_region
      %s57 = ssub.s32 2048, 2048
      %58 = vsyncadd [#allocation10], %s57
      %s59 = sshll.u32 [#allocation9], 4
      %s60 = int_to_ptr.vmem [resolvable:$true] %s59
      %65 = dma.hbm_to_vmem [thread:$0]  %s5, 2048, %s60, [#allocation10], 128, 128, 8
    $region25: #{tpu_custom_call.1} parent=1 // pred_fallthru
      _
    // Predicated region
    $region26: #{tpu_custom_call.1} parent=1 // pred_check
      _
    $region27: #{tpu_custom_call.1} parent=1 // pred_check_branch
      %67 = sbr.rel (0) target = $region29
    $region28: #{tpu_custom_call.1} parent=1 // pred_region
      _
    $region29: #{tpu_custom_call.1} parent=1 // pred_fallthru
      _
    // Predicated region
    $region30: #{tpu_custom_call.1} parent=1 // pred_check
      _
    $region31: #{tpu_custom_call.1} parent=1 // pred_check_branch
      %69 = sbr.rel (0) target = $region33
    $region32: #{tpu_custom_call.1} parent=1 // pred_region
      %70 = dma.done [#allocation4], 128
    $region33: #{tpu_custom_call.1} parent=1 // pred_fallthru
      _
    // Predicated region
    $region34: #{tpu_custom_call.1} parent=1 // pred_check
      _
    $region35: #{tpu_custom_call.1} parent=1 // pred_check_branch
      %72 = sbr.rel (0) target = $region37
    $region36: #{tpu_custom_call.1} parent=1 // pred_region
      %73 = dma.done [#allocation7], 1024
    $region37: #{tpu_custom_call.1} parent=1 // pred_fallthru
      _
    // Predicated region
    $region38: #{tpu_custom_call.1} parent=1 // pred_check
      _
    $region39: #{tpu_custom_call.1} parent=1 // pred_check_branch
      %75 = sbr.rel (0) target = $region41
    $region40: #{tpu_custom_call.1} parent=1 // pred_region
      %76 = dma.done [#allocation7], 2048
    $region41: #{tpu_custom_call.1} parent=1 // pred_fallthru
      _
    // Predicated region
    $region42: #{tpu_custom_call.1} parent=1 // pred_check
      _
    $region43: #{tpu_custom_call.1} parent=1 // pred_check_branch
      %78 = sbr.rel (0) target = $region45
    $region44: #{tpu_custom_call.1} parent=1 // pred_region
      %79 = dma.done [#allocation10], 2048
    $region45: #{tpu_custom_call.1} parent=1 // pred_fallthru
      _
    %p80 = scmp.eq.s32.totalorder 0, 0
    // Predicated region
    $region46: #{tpu_custom_call.1} parent=1 // pred_check
      %p81 = pneg %p80
    $region47: #{tpu_custom_call.1} parent=1 // pred_check_branch
      %83 = sbr.rel (%p81) target = $region49
    $region48: #{tpu_custom_call.1} parent=1 // pred_region
      %84 = vst [vmem:[#allocation2] sm:$0xff] 0.0
    $region49: #{tpu_custom_call.1} parent=1 // pred_fallthru
      _
    %v85 = vld [vmem:[#allocation2] sm:$0xff]
    %v86 = vld [vmem:[#allocation3] sm:$0xff]
    %v87 = vld [vmem:[#allocation6] sm:$0xff]
    %v88 = vld [vmem:[#allocation6 + $0x8] sm:$0xff]
    %v89 = vld [vmem:[#allocation6 + $0x10] sm:$0xff]
    %v90 = vld [vmem:[#allocation6 + $0x18] sm:$0xff]
    %v91 = vld [vmem:[#allocation6 + $0x20] sm:$0xff]
    %v92 = vld [vmem:[#allocation6 + $0x28] sm:$0xff]
    %v93 = vld [vmem:[#allocation6 + $0x30] sm:$0xff]
    %v94 = vld [vmem:[#allocation6 + $0x38] sm:$0xff]
    %vm95 = vcmask 523264
    %v97 = vsel %vm95, %v86, 0
    %99 = vmatprep.subr.mxu0 0.0
    %100 = vmatpush1.msra.mxu0 0.0
    %101 = vmatprep.subr.mxu0 0.0
    %102 = vmatpush1.msra.mxu0 0.0
    %103 = vmatprep.subr.mxu0 0.0
    %104 = vmatpush1.msra.mxu0 0.0
    %105 = vmatprep.subr.mxu0 0.0
    %106 = vmatpush1.msra.mxu0 0.0
    %107 = vmatprep.subr.mxu0 0.0
    %108 = vmatpush1.msra.mxu0 0.0
    %109 = vmatprep.subr.mxu0 0.0
    %110 = vmatpush1.msra.mxu0 0.0
    %111 = vmatprep.subr.mxu0 0.0
    %112 = vmatpush1.msra.mxu0 0.0
    %113 = vmatprep.subr.mxu0 0.0
    %114 = vmatpush1.msra.mxu0 0.0
    %115 = vmatprep.subr.mxu0 0.0
    %116 = vmatpush1.msra.mxu0 %v94
    %117 = vmatprep.subr.mxu0 0.0
    %118 = vmatpush1.msra.mxu0 %v93
    %119 = vmatprep.subr.mxu0 0.0
    %120 = vmatpush1.msra.mxu0 %v92
    %121 = vmatprep.subr.mxu0 0.0
    %122 = vmatpush1.msra.mxu0 %v91
    %123 = vmatprep.subr.mxu0 0.0
    %124 = vmatpush1.msra.mxu0 %v90
    %125 = vmatprep.subr.mxu0 0.0
    %126 = vmatpush1.msra.mxu0 %v89
    %127 = vmatprep.subr.mxu0 0.0
    %128 = vmatpush1.msra.mxu0 %v88
    %129 = vmatprep.subr.mxu0 0.0
    %130 = vmatpush1.msra.mxu0 %v87
    %131 = vmatprep.subr.mxu0 0.0
    %132 = vmatpush2.msra.mxu0 0.0
    %133 = vmatprep.subr.mxu0 0.0
    %134 = vmatpush2.msra.mxu0 0.0
    %135 = vmatprep.subr.mxu0 0.0
    %136 = vmatpush2.msra.mxu0 0.0
    %137 = vmatprep.subr.mxu0 0.0
    %138 = vmatpush2.msra.mxu0 0.0
    %139 = vmatprep.subr.mxu0 0.0
    %140 = vmatpush2.msra.mxu0 0.0
    %141 = vmatprep.subr.mxu0 0.0
    %142 = vmatpush2.msra.mxu0 0.0
    %143 = vmatprep.subr.mxu0 0.0
    %144 = vmatpush2.msra.mxu0 0.0
    %145 = vmatprep.subr.mxu0 0.0
    %146 = vmatpush2.msra.mxu0 0.0
    %147 = vmatprep.subr.mxu0 0.0
    %148 = vmatpush2.msra.mxu0 0.0
    %149 = vmatprep.subr.mxu0 0.0
    %150 = vmatpush2.msra.mxu0 0.0
    %151 = vmatprep.subr.mxu0 0.0
    %152 = vmatpush2.msra.mxu0 0.0
    %153 = vmatprep.subr.mxu0 0.0
    %154 = vmatpush2.msra.mxu0 0.0
    %155 = vmatprep.subr.mxu0 0.0
    %156 = vmatpush2.msra.mxu0 0.0
    %157 = vmatprep.subr.mxu0 0.0
    %158 = vmatpush2.msra.mxu0 0.0
    %159 = vmatprep.subr.mxu0 0.0
    %160 = vmatpush2.msra.mxu0 0.0
    %161 = vmatprep.subr.mxu0 0.0
    %162 = vmatpush2.msra.mxu0 0.0
    %163 = vmatprep.mubr.f32.mxu0 0.0
    %164 = vmatmul.mubr.f32.gmra.mxu0 %v97
    %v165 = vpop.f32.mrf.mxu0
    %v166 = vadd.f32 0.0, %v165
    %v167 = vpop.f32.mrf.mxu0
    %168 = vdwg.mxu0
    %v169 = vadd.f32 %v85, %v166
    %170 = vst [vmem:[#allocation2] sm:$0xff] %v169
    // Predicated region
    $region50: #{tpu_custom_call.1} parent=1 // pred_check
      %p171 = pneg %p80
    $region51: #{tpu_custom_call.1} parent=1 // pred_check_branch
      %173 = sbr.rel (%p171) target = $region53
    $region52: #{tpu_custom_call.1} parent=1 // pred_region
      %v174 = vld [vmem:[#allocation2] sm:$0xff]
      %v175 = vld [vmem:[%s2] sm:$0x1]
      %v177 = vlaneseq
      %v178 = vshrl.u32 %v177, 7
      %v179 = vsub.s32 0, %v178
      %v180 = vrot.slane %v175, %v179
      %v182 = vadd.f32 %v174, %v180
      %v183 = vmax.f32 %v182, 0.0
      %v184 = vld [vmem:[#allocation8] sm:$0xff]
      %v185 = vld [vmem:[#allocation8 + $0x8] sm:$0xff]
      %v186 = vld [vmem:[#allocation8 + $0x10] sm:$0xff]
      %v187 = vld [vmem:[#allocation8 + $0x18] sm:$0xff]
      %v188 = vld [vmem:[#allocation8 + $0x20] sm:$0xff]
      %v189 = vld [vmem:[#allocation8 + $0x28] sm:$0xff]
      %v190 = vld [vmem:[#allocation8 + $0x30] sm:$0xff]
      %v191 = vld [vmem:[#allocation8 + $0x38] sm:$0xff]
      %v192 = vld [vmem:[#allocation8 + $0x40] sm:$0xff]
      %v193 = vld [vmem:[#allocation8 + $0x48] sm:$0xff]
      %v194 = vld [vmem:[#allocation8 + $0x50] sm:$0xff]
      %v195 = vld [vmem:[#allocation8 + $0x58] sm:$0xff]
      %v196 = vld [vmem:[#allocation8 + $0x60] sm:$0xff]
      %v197 = vld [vmem:[#allocation8 + $0x68] sm:$0xff]
      %v198 = vld [vmem:[#allocation8 + $0x70] sm:$0xff]
      %v199 = vld [vmem:[#allocation8 + $0x78] sm:$0xff]
      %v200 = vld [vmem:[%s4] sm:$0x1]
      %v202 = vlaneseq
      %v203 = vshrl.u32 %v202, 7
      %v204 = vsub.s32 0, %v203
      %v205 = vrot.slane %v200, %v204
      %207 = vmatprep.subr.mxu0 0.0
      %208 = vmatpush1.msra.mxu0 %v199
      %209 = vmatprep.subr.mxu0 0.0
      %210 = vmatpush1.msra.mxu0 %v198
      %211 = vmatprep.subr.mxu0 0.0
      %212 = vmatpush1.msra.mxu0 %v197
      %213 = vmatprep.subr.mxu0 0.0
      %214 = vmatpush1.msra.mxu0 %v196
      %215 = vmatprep.subr.mxu0 0.0
      %216 = vmatpush1.msra.mxu0 %v195
      %217 = vmatprep.subr.mxu0 0.0
      %218 = vmatpush1.msra.mxu0 %v194
      %219 = vmatprep.subr.mxu0 0.0
      %220 = vmatpush1.msra.mxu0 %v193
      %221 = vmatprep.subr.mxu0 0.0
      %222 = vmatpush1.msra.mxu0 %v192
      %223 = vmatprep.subr.mxu0 0.0
      %224 = vmatpush1.msra.mxu0 %v191
      %225 = vmatprep.subr.mxu0 0.0
      %226 = vmatpush1.msra.mxu0 %v190
      %227 = vmatprep.subr.mxu0 0.0
      %228 = vmatpush1.msra.mxu0 %v189
      %229 = vmatprep.subr.mxu0 0.0
      %230 = vmatpush1.msra.mxu0 %v188
      %231 = vmatprep.subr.mxu0 0.0
      %232 = vmatpush1.msra.mxu0 %v187
      %233 = vmatprep.subr.mxu0 0.0
      %234 = vmatpush1.msra.mxu0 %v186
      %235 = vmatprep.subr.mxu0 0.0
      %236 = vmatpush1.msra.mxu0 %v185
      %237 = vmatprep.subr.mxu0 0.0
      %238 = vmatpush1.msra.mxu0 %v184
      %239 = vmatprep.subr.mxu0 0.0
      %240 = vmatpush2.msra.mxu0 0.0
      %241 = vmatprep.subr.mxu0 0.0
      %242 = vmatpush2.msra.mxu0 0.0
      %243 = vmatprep.subr.mxu0 0.0
      %244 = vmatpush2.msra.mxu0 0.0
      %245 = vmatprep.subr.mxu0 0.0
      %246 = vmatpush2.msra.mxu0 0.0
      %247 = vmatprep.subr.mxu0 0.0
      %248 = vmatpush2.msra.mxu0 0.0
      %249 = vmatprep.subr.mxu0 0.0
      %250 = vmatpush2.msra.mxu0 0.0
      %251 = vmatprep.subr.mxu0 0.0
      %252 = vmatpush2.msra.mxu0 0.0
      %253 = vmatprep.subr.mxu0 0.0
      %254 = vmatpush2.msra.mxu0 0.0
      %255 = vmatprep.subr.mxu0 0.0
      %256 = vmatpush2.msra.mxu0 0.0
      %257 = vmatprep.subr.mxu0 0.0
      %258 = vmatpush2.msra.mxu0 0.0
      %259 = vmatprep.subr.mxu0 0.0
      %260 = vmatpush2.msra.mxu0 0.0
      %261 = vmatprep.subr.mxu0 0.0
      %262 = vmatpush2.msra.mxu0 0.0
      %263 = vmatprep.subr.mxu0 0.0
      %264 = vmatpush2.msra.mxu0 0.0
      %265 = vmatprep.subr.mxu0 0.0
      %266 = vmatpush2.msra.mxu0 0.0
      %267 = vmatprep.subr.mxu0 0.0
      %268 = vmatpush2.msra.mxu0 0.0
      %269 = vmatprep.subr.mxu0 0.0
      %270 = vmatpush2.msra.mxu0 0.0
      %271 = vmatprep.mubr.f32.mxu0 0.0
      %272 = vmatmul.mubr.f32.gmra.mxu0 %v183
      %v273 = vpop.f32.mrf.mxu0
      %v274 = vadd.f32 %v205, %v273
      %v275 = vpop.f32.mrf.mxu0
      %276 = vdwg.mxu0
      %v277 = vmax.f32 %v274, 0.0
      %v278 = vld [vmem:[#allocation9] sm:$0xff]
      %v279 = vld [vmem:[#allocation9 + $0x8] sm:$0xff]
      %v280 = vld [vmem:[#allocation9 + $0x10] sm:$0xff]
      %v281 = vld [vmem:[#allocation9 + $0x18] sm:$0xff]
      %v282 = vld [vmem:[#allocation9 + $0x20] sm:$0xff]
      %v283 = vld [vmem:[#allocation9 + $0x28] sm:$0xff]
      %v284 = vld [vmem:[#allocation9 + $0x30] sm:$0xff]
      %v285 = vld [vmem:[#allocation9 + $0x38] sm:$0xff]
      %v286 = vld [vmem:[#allocation9 + $0x40] sm:$0xff]
      %v287 = vld [vmem:[#allocation9 + $0x48] sm:$0xff]
      %v288 = vld [vmem:[#allocation9 + $0x50] sm:$0xff]
      %v289 = vld [vmem:[#allocation9 + $0x58] sm:$0xff]
      %v290 = vld [vmem:[#allocation9 + $0x60] sm:$0xff]
      %v291 = vld [vmem:[#allocation9 + $0x68] sm:$0xff]
      %v292 = vld [vmem:[#allocation9 + $0x70] sm:$0xff]
      %v293 = vld [vmem:[#allocation9 + $0x78] sm:$0xff]
      %v294 = vld [vmem:[%s6] sm:$0x1]
      %v296 = vlaneseq
      %v297 = vshrl.u32 %v296, 7
      %v298 = vsub.s32 0, %v297
      %v299 = vrot.slane %v294, %v298
      %301 = vmatprep.subr.mxu0 0.0
      %302 = vmatpush1.msra.mxu0 %v293
      %303 = vmatprep.subr.mxu0 0.0
      %304 = vmatpush1.msra.mxu0 %v292
      %305 = vmatprep.subr.mxu0 0.0
      %306 = vmatpush1.msra.mxu0 %v291
      %307 = vmatprep.subr.mxu0 0.0
      %308 = vmatpush1.msra.mxu0 %v290
      %309 = vmatprep.subr.mxu0 0.0
      %310 = vmatpush1.msra.mxu0 %v289
      %311 = vmatprep.subr.mxu0 0.0
      %312 = vmatpush1.msra.mxu0 %v288
      %313 = vmatprep.subr.mxu0 0.0
      %314 = vmatpush1.msra.mxu0 %v287
      %315 = vmatprep.subr.mxu0 0.0
      %316 = vmatpush1.msra.mxu0 %v286
      %317 = vmatprep.subr.mxu0 0.0
      %318 = vmatpush1.msra.mxu0 %v285
      %319 = vmatprep.subr.mxu0 0.0
      %320 = vmatpush1.msra.mxu0 %v284
      %321 = vmatprep.subr.mxu0 0.0
      %322 = vmatpush1.msra.mxu0 %v283
      %323 = vmatprep.subr.mxu0 0.0
      %324 = vmatpush1.msra.mxu0 %v282
      %325 = vmatprep.subr.mxu0 0.0
      %326 = vmatpush1.msra.mxu0 %v281
      %327 = vmatprep.subr.mxu0 0.0
      %328 = vmatpush1.msra.mxu0 %v280
      %329 = vmatprep.subr.mxu0 0.0
      %330 = vmatpush1.msra.mxu0 %v279
      %331 = vmatprep.subr.mxu0 0.0
      %332 = vmatpush1.msra.mxu0 %v278
      %333 = vmatprep.subr.mxu0 0.0
      %334 = vmatpush2.msra.mxu0 0.0
      %335 = vmatprep.subr.mxu0 0.0
      %336 = vmatpush2.msra.mxu0 0.0
      %337 = vmatprep.subr.mxu0 0.0
      %338 = vmatpush2.msra.mxu0 0.0
      %339 = vmatprep.subr.mxu0 0.0
      %340 = vmatpush2.msra.mxu0 0.0
      %341 = vmatprep.subr.mxu0 0.0
      %342 = vmatpush2.msra.mxu0 0.0
      %343 = vmatprep.subr.mxu0 0.0
      %344 = vmatpush2.msra.mxu0 0.0
      %345 = vmatprep.subr.mxu0 0.0
      %346 = vmatpush2.msra.mxu0 0.0
      %347 = vmatprep.subr.mxu0 0.0
      %348 = vmatpush2.msra.mxu0 0.0
      %349 = vmatprep.subr.mxu0 0.0
      %350 = vmatpush2.msra.mxu0 0.0
      %351 = vmatprep.subr.mxu0 0.0
      %352 = vmatpush2.msra.mxu0 0.0
      %353 = vmatprep.subr.mxu0 0.0
      %354 = vmatpush2.msra.mxu0 0.0
      %355 = vmatprep.subr.mxu0 0.0
      %356 = vmatpush2.msra.mxu0 0.0
      %357 = vmatprep.subr.mxu0 0.0
      %358 = vmatpush2.msra.mxu0 0.0
      %359 = vmatprep.subr.mxu0 0.0
      %360 = vmatpush2.msra.mxu0 0.0
      %361 = vmatprep.subr.mxu0 0.0
      %362 = vmatpush2.msra.mxu0 0.0
      %363 = vmatprep.subr.mxu0 0.0
      %364 = vmatpush2.msra.mxu0 0.0
      %365 = vmatprep.mubr.f32.mxu0 0.0
      %366 = vmatmul.mubr.f32.gmra.mxu0 %v277
      %v367 = vpop.f32.mrf.mxu0
      %v368 = vadd.f32 %v299, %v367
      %v369 = vpop.f32.mrf.mxu0
      %370 = vdwg.mxu0
      %371 = vst [vmem:[#allocation11] sm:$0xff] %v368
    $region53: #{tpu_custom_call.1} parent=1 // pred_fallthru
      _
    // Predicated region
    $region54: #{tpu_custom_call.1} parent=1 // pred_check
      _
    $region55: #{tpu_custom_call.1} parent=1 // pred_check_branch
      %373 = sbr.rel (0) target = $region57
    $region56: #{tpu_custom_call.1} parent=1 // pred_region
      %s375 = ssub.s32 128, 128
      %376 = vsyncadd [#allocation5], %s375
      %s378 = sshll.u32 [#allocation11], 4
      %s379 = int_to_ptr.vmem [resolvable:$true] %s378
      %381 = dma.vmem_to_hbm [thread:$0]  %s379, 128, %s7, [#allocation5]
    $region57: #{tpu_custom_call.1} parent=1 // pred_fallthru
      _
    // Predicated region
    $region58: #{tpu_custom_call.1} parent=1 // pred_check
      _
    $region59: #{tpu_custom_call.1} parent=1 // pred_check_branch
      %383 = sbr.rel (0) target = $region61
    $region60: #{tpu_custom_call.1} parent=1 // pred_region
      %384 = dma.done [#allocation5], 128
    $region61: #{tpu_custom_call.1} parent=1 // pred_fallthru
      _
    %385 = vsyncpa [#allocation4], 1
    %386 = vsyncpa [#allocation7], 1
    %387 = vsyncpa [#allocation10], 1
    %388 = vsyncpa [#allocation5], 1

// kernel: tpu_custom_call.1
$region0: #{tpu_custom_call.1}
  #allocation0 [shape = 'u32[]', space=smem, size = 0x4, offset = 0x4, fixed_abs, tag = 'smem constant byte address 0x4 - core index']
  #allocation1 [shape = 'u32[144,128]{1,0:T(1,128)}', space=vmem, size = 0x12000, scoped, tag = 'internal scratch']
  #allocation2 [shape = 'f32[8,128]{1,0:T(8,128)}', space=vmem, size = 0x1000, scoped, tag = 'scratch operand']
  %s0 = inlined_call_operand.hbm [shape: f32[8,64], index: 0, kind: input, shape index: {}]
  %s1 = inlined_call_operand.hbm [shape: f32[64,128], index: 1, kind: input, shape index: {}]
  %s2 = inlined_call_operand.vmem [shape: f32[1,128], index: 2, kind: input, shape index: {}]
  %s3 = inlined_call_operand.hbm [shape: f32[128,128], index: 3, kind: input, shape index: {}]
  %s4 = inlined_call_operand.vmem [shape: f32[1,128], index: 4, kind: input, shape index: {}]
  %s5 = inlined_call_operand.hbm [shape: f32[128,128], index: 5, kind: input, shape index: {}]
  %s6 = inlined_call_operand.vmem [shape: f32[1,128], index: 6, kind: input, shape index: {}]
  %s7 = inlined_call_operand.hbm [shape: f32[8,128], index: 7, kind: output, shape index: {}]
  %s8 = sld [smem:[#allocation0]]
  $region62: #{tpu_custom_call.1} parent=0
    _
  %s10 = ssub.s32 1, %s8
  %s11 = scalar_select 0, %s10, %s8
  $region1: #{tpu_custom_call.1} parent=0
    #allocation3 [shape = 'u8[4096]{0}', space=vmem, size = 0x1000, scoped, tag = 'input window, operand 0, single buffered']
    #allocation4 [shape = 's32[1]{0}', space=sflag, size = 0x4, scoped, tag = 'scoped memory for tpu_custom_call.1']
    #allocation5 [shape = 's32[1]{0}', space=sflag, size = 0x4, scoped, tag = 'scoped memory for tpu_custom_call.1']
    #allocation6 [shape = 'u8[32768]{0}', space=vmem, size = 0x8000, scoped, tag = 'input window, operand 1, single buffered']
    #allocation7 [shape = 's32[1]{0}', space=sflag, size = 0x4, scoped, tag = 'scoped memory for tpu_custom_call.1']
    #allocation8 [shape = 'u8[65536]{0}', space=vmem, size = 0x10000, scoped, tag = 'input window, operand 3, single buffered']
    #allocation9 [shape = 'u8[65536]{0}', space=vmem, size = 0x10000, scoped, tag = 'input window, operand 5, single buffered']
    #allocation10 [shape = 's32[1]{0}', space=sflag, size = 0x4, scoped, tag = 'scoped memory for tpu_custom_call.1']
    #allocation11 [shape = 'u8[4096]{0}', space=vmem, size = 0x1000, scoped, tag = 'output window, operand 0, single buffered']
    %12 = vsyncpa [#allocation4], 0
    %13 = vsyncpa [#allocation7], 0
    %14 = vsyncpa [#allocation10], 0
    %15 = vsyncpa [#allocation5], 0
    // Predicated region
    $region2: #{tpu_custom_call.1} parent=1 // pred_check
      _
    $region3: #{tpu_custom_call.1} parent=1 // pred_check_branch
      %17 = sbr.rel (0) target = $region5
    $region4: #{tpu_custom_call.1} parent=1 // pred_region
      %s19 = ssub.s32 128, 128
      %20 = vsyncadd [#allocation4], %s19
      %s22 = sshll.u32 [#allocation3], 4
      %s23 = int_to_ptr.vmem [resolvable:$true] %s22
      %25 = dma.hbm_to_vmem [thread:$0]  %s0, 128, %s23, [#allocation4]
    $region5: #{tpu_custom_call.1} parent=1 // pred_fallthru
      _
    // Predicated region
    $region6: #{tpu_custom_call.1} parent=1 // pred_check
      _
    $region7: #{tpu_custom_call.1} parent=1 // pred_check_branch
      %27 = sbr.rel (0) target = $region9
    $region8: #{tpu_custom_call.1} parent=1 // pred_region
      %s29 = ssub.s32 1024, 1024
      %30 = vsyncadd [#allocation7], %s29
      %s31 = sshll.u32 [#allocation6], 4
      %s32 = int_to_ptr.vmem [resolvable:$true] %s31
      %37 = dma.hbm_to_vmem [thread:$0]  %s1, 1024, %s32, [#allocation7], 128, 128, 8
    $region9: #{tpu_custom_call.1} parent=1 // pred_fallthru
      _
    // Predicated region
    $region10: #{tpu_custom_call.1} parent=1 // pred_check
      _
    $region11: #{tpu_custom_call.1} parent=1 // pred_check_branch
      %39 = sbr.rel (0) target = $region13
    $region12: #{tpu_custom_call.1} parent=1 // pred_region
      _
    $region13: #{tpu_custom_call.1} parent=1 // pred_fallthru
      _
    // Predicated region
    $region14: #{tpu_custom_call.1} parent=1 // pred_check
      _
    $region15: #{tpu_custom_call.1} parent=1 // pred_check_branch
      %41 = sbr.rel (0) target = $region17
    $region16: #{tpu_custom_call.1} parent=1 // pred_region
      %s43 = ssub.s32 2048, 2048
      %44 = vsyncadd [#allocation7], %s43
      %s45 = sshll.u32 [#allocation8], 4
      %s46 = int_to_ptr.vmem [resolvable:$true] %s45
      %51 = dma.hbm_to_vmem [thread:$0]  %s3, 2048, %s46, [#allocation7], 128, 128, 8
    $region17: #{tpu_custom_call.1} parent=1 // pred_fallthru
      _
    // Predicated region
    $region18: #{tpu_custom_call.1} parent=1 // pred_check
      _
    $region19: #{tpu_custom_call.1} parent=1 // pred_check_branch
      %53 = sbr.rel (0) target = $region21
    $region20: #{tpu_custom_call.1} parent=1 // pred_region
      _
    $region21: #{tpu_custom_call.1} parent=1 // pred_fallthru
      _
    // Predicated region
    $region22: #{tpu_custom_call.1} parent=1 // pred_check
      _
    $region23: #{tpu_custom_call.1} parent=1 // pred_check_branch
      %55 = sbr.rel (0) target = $region25
    $region24: #{tpu_custom_call.1} parent=1 // pred_region
      %s57 = ssub.s32 2048, 2048
      %58 = vsyncadd [#allocation10], %s57
      %s59 = sshll.u32 [#allocation9], 4
      %s60 = int_to_ptr.vmem [resolvable:$true] %s59
      %65 = dma.hbm_to_vmem [thread:$0]  %s5, 2048, %s60, [#allocation10], 128, 128, 8
    $region25: #{tpu_custom_call.1} parent=1 // pred_fallthru
      _
    // Predicated region
    $region26: #{tpu_custom_call.1} parent=1 // pred_check
      _
    $region27: #{tpu_custom_call.1} parent=1 // pred_check_branch
      %67 = sbr.rel (0) target = $region29
    $region28: #{tpu_custom_call.1} parent=1 // pred_region
      _
    $region29: #{tpu_custom_call.1} parent=1 // pred_fallthru
      _
    // Predicated region
    $region30: #{tpu_custom_call.1} parent=1 // pred_check
      _
    $region31: #{tpu_custom_call.1} parent=1 // pred_check_branch
      %69 = sbr.rel (0) target = $region33
    $region32: #{tpu_custom_call.1} parent=1 // pred_region
      %70 = dma.done [#allocation4], 128
    $region33: #{tpu_custom_call.1} parent=1 // pred_fallthru
      _
    // Predicated region
    $region34: #{tpu_custom_call.1} parent=1 // pred_check
      _
    $region35: #{tpu_custom_call.1} parent=1 // pred_check_branch
      %72 = sbr.rel (0) target = $region37
    $region36: #{tpu_custom_call.1} parent=1 // pred_region
      %73 = dma.done [#allocation7], 1024
    $region37: #{tpu_custom_call.1} parent=1 // pred_fallthru
      _
    // Predicated region
    $region38: #{tpu_custom_call.1} parent=1 // pred_check
      _
    $region39: #{tpu_custom_call.1} parent=1 // pred_check_branch
      %75 = sbr.rel (0) target = $region41
    $region40: #{tpu_custom_call.1} parent=1 // pred_region
      %76 = dma.done [#allocation7], 2048
    $region41: #{tpu_custom_call.1} parent=1 // pred_fallthru
      _
    // Predicated region
    $region42: #{tpu_custom_call.1} parent=1 // pred_check
      _
    $region43: #{tpu_custom_call.1} parent=1 // pred_check_branch
      %78 = sbr.rel (0) target = $region45
    $region44: #{tpu_custom_call.1} parent=1 // pred_region
      %79 = dma.done [#allocation10], 2048
    $region45: #{tpu_custom_call.1} parent=1 // pred_fallthru
      _
    %p80 = scmp.eq.s32.totalorder 0, 0
    // Predicated region
    $region46: #{tpu_custom_call.1} parent=1 // pred_check
      %p81 = pneg %p80
    $region47: #{tpu_custom_call.1} parent=1 // pred_check_branch
      %83 = sbr.rel (%p81) target = $region49
    $region48: #{tpu_custom_call.1} parent=1 // pred_region
      %84 = vst [vmem:[#allocation2] sm:$0xff] 0.0
    $region49: #{tpu_custom_call.1} parent=1 // pred_fallthru
      _
    %v85 = vld [vmem:[#allocation2] sm:$0xff]
    %v86 = vld [vmem:[#allocation3] sm:$0xff]
    %v87 = vld [vmem:[#allocation6] sm:$0xff]
    %v88 = vld [vmem:[#allocation6 + $0x8] sm:$0xff]
    %v89 = vld [vmem:[#allocation6 + $0x10] sm:$0xff]
    %v90 = vld [vmem:[#allocation6 + $0x18] sm:$0xff]
    %v91 = vld [vmem:[#allocation6 + $0x20] sm:$0xff]
    %v92 = vld [vmem:[#allocation6 + $0x28] sm:$0xff]
    %v93 = vld [vmem:[#allocation6 + $0x30] sm:$0xff]
    %v94 = vld [vmem:[#allocation6 + $0x38] sm:$0xff]
    %vm95 = vcmask 523264
    %v97 = vsel %vm95, %v86, 0
    %99 = vmatprep.subr.mxu0 0.0
    %100 = vmatpush1.msra.mxu0 0.0
    %101 = vmatprep.subr.mxu0 0.0
    %102 = vmatpush1.msra.mxu0 0.0
    %103 = vmatprep.subr.mxu0 0.0
    %104 = vmatpush1.msra.mxu0 0.0
    %105 = vmatprep.subr.mxu0 0.0
    %106 = vmatpush1.msra.mxu0 0.0
    %107 = vmatprep.subr.mxu0 0.0
    %108 = vmatpush1.msra.mxu0 0.0
    %109 = vmatprep.subr.mxu0 0.0
    %110 = vmatpush1.msra.mxu0 0.0
    %111 = vmatprep.subr.mxu0 0.0
    %112 = vmatpush1.msra.mxu0 0.0
    %113 = vmatprep.subr.mxu0 0.0
    %114 = vmatpush1.msra.mxu0 0.0
    %115 = vmatprep.subr.mxu0 0.0
    %116 = vmatpush1.msra.mxu0 %v94
    %117 = vmatprep.subr.mxu0 0.0
    %118 = vmatpush1.msra.mxu0 %v93
    %119 = vmatprep.subr.mxu0 0.0
    %120 = vmatpush1.msra.mxu0 %v92
    %121 = vmatprep.subr.mxu0 0.0
    %122 = vmatpush1.msra.mxu0 %v91
    %123 = vmatprep.subr.mxu0 0.0
    %124 = vmatpush1.msra.mxu0 %v90
    %125 = vmatprep.subr.mxu0 0.0
    %126 = vmatpush1.msra.mxu0 %v89
    %127 = vmatprep.subr.mxu0 0.0
    %128 = vmatpush1.msra.mxu0 %v88
    %129 = vmatprep.subr.mxu0 0.0
    %130 = vmatpush1.msra.mxu0 %v87
    %131 = vmatprep.subr.mxu0 0.0
    %132 = vmatpush2.msra.mxu0 0.0
    %133 = vmatprep.subr.mxu0 0.0
    %134 = vmatpush2.msra.mxu0 0.0
    %135 = vmatprep.subr.mxu0 0.0
    %136 = vmatpush2.msra.mxu0 0.0
    %137 = vmatprep.subr.mxu0 0.0
    %138 = vmatpush2.msra.mxu0 0.0
    %139 = vmatprep.subr.mxu0 0.0
    %140 = vmatpush2.msra.mxu0 0.0
    %141 = vmatprep.subr.mxu0 0.0
    %142 = vmatpush2.msra.mxu0 0.0
    %143 = vmatprep.subr.mxu0 0.0
    %144 = vmatpush2.msra.mxu0 0.0
    %145 = vmatprep.subr.mxu0 0.0
    %146 = vmatpush2.msra.mxu0 0.0
    %147 = vmatprep.subr.mxu0 0.0
    %148 = vmatpush2.msra.mxu0 0.0
    %149 = vmatprep.subr.mxu0 0.0
    %150 = vmatpush2.msra.mxu0 0.0
    %151 = vmatprep.subr.mxu0 0.0
    %152 = vmatpush2.msra.mxu0 0.0
    %153 = vmatprep.subr.mxu0 0.0
    %154 = vmatpush2.msra.mxu0 0.0
    %155 = vmatprep.subr.mxu0 0.0
    %156 = vmatpush2.msra.mxu0 0.0
    %157 = vmatprep.subr.mxu0 0.0
    %158 = vmatpush2.msra.mxu0 0.0
    %159 = vmatprep.subr.mxu0 0.0
    %160 = vmatpush2.msra.mxu0 0.0
    %161 = vmatprep.subr.mxu0 0.0
    %162 = vmatpush2.msra.mxu0 0.0
    %163 = vmatprep.mubr.f32.mxu0 0.0
    %164 = vmatmul.mubr.f32.gmra.mxu0 %v97
    %v165 = vpop.f32.mrf.mxu0
    %v166 = vadd.f32 0.0, %v165
    %v167 = vpop.f32.mrf.mxu0
    %168 = vdwg.mxu0
    %v169 = vadd.f32 %v85, %v166
    %170 = vst [vmem:[#allocation2] sm:$0xff] %v169
    // Predicated region
    $region50: #{tpu_custom_call.1} parent=1 // pred_check
      %p171 = pneg %p80
    $region51: #{tpu_custom_call.1} parent=1 // pred_check_branch
      %173 = sbr.rel (%p171) target = $region53
    $region52: #{tpu_custom_call.1} parent=1 // pred_region
      %v174 = vld [vmem:[#allocation2] sm:$0xff]
      %v175 = vld [vmem:[%s2] sm:$0x1]
      %v177 = vlaneseq
      %v178 = vshrl.u32 %v177, 7
      %v179 = vsub.s32 0, %v178
      %v180 = vrot.slane %v175, %v179
      %v182 = vadd.f32 %v174, %v180
      %v183 = vmax.f32 %v182, 0.0
      %v184 = vld [vmem:[#allocation8] sm:$0xff]
      %v185 = vld [vmem:[#allocation8 + $0x8] sm:$0xff]
      %v186 = vld [vmem:[#allocation8 + $0x10] sm:$0xff]
      %v187 = vld [vmem:[#allocation8 + $0x18] sm:$0xff]
      %v188 = vld [vmem:[#allocation8 + $0x20] sm:$0xff]
      %v189 = vld [vmem:[#allocation8 + $0x28] sm:$0xff]
      %v190 = vld [vmem:[#allocation8 + $0x30] sm:$0xff]
      %v191 = vld [vmem:[#allocation8 + $0x38] sm:$0xff]
      %v192 = vld [vmem:[#allocation8 + $0x40] sm:$0xff]
      %v193 = vld [vmem:[#allocation8 + $0x48] sm:$0xff]
      %v194 = vld [vmem:[#allocation8 + $0x50] sm:$0xff]
      %v195 = vld [vmem:[#allocation8 + $0x58] sm:$0xff]
      %v196 = vld [vmem:[#allocation8 + $0x60] sm:$0xff]
      %v197 = vld [vmem:[#allocation8 + $0x68] sm:$0xff]
      %v198 = vld [vmem:[#allocation8 + $0x70] sm:$0xff]
      %v199 = vld [vmem:[#allocation8 + $0x78] sm:$0xff]
      %v200 = vld [vmem:[%s4] sm:$0x1]
      %v202 = vlaneseq
      %v203 = vshrl.u32 %v202, 7
      %v204 = vsub.s32 0, %v203
      %v205 = vrot.slane %v200, %v204
      %207 = vmatprep.subr.mxu0 0.0
      %208 = vmatpush1.msra.mxu0 %v199
      %209 = vmatprep.subr.mxu0 0.0
      %210 = vmatpush1.msra.mxu0 %v198
      %211 = vmatprep.subr.mxu0 0.0
      %212 = vmatpush1.msra.mxu0 %v197
      %213 = vmatprep.subr.mxu0 0.0
      %214 = vmatpush1.msra.mxu0 %v196
      %215 = vmatprep.subr.mxu0 0.0
      %216 = vmatpush1.msra.mxu0 %v195
      %217 = vmatprep.subr.mxu0 0.0
      %218 = vmatpush1.msra.mxu0 %v194
      %219 = vmatprep.subr.mxu0 0.0
      %220 = vmatpush1.msra.mxu0 %v193
      %221 = vmatprep.subr.mxu0 0.0
      %222 = vmatpush1.msra.mxu0 %v192
      %223 = vmatprep.subr.mxu0 0.0
      %224 = vmatpush1.msra.mxu0 %v191
      %225 = vmatprep.subr.mxu0 0.0
      %226 = vmatpush1.msra.mxu0 %v190
      %227 = vmatprep.subr.mxu0 0.0
      %228 = vmatpush1.msra.mxu0 %v189
      %229 = vmatprep.subr.mxu0 0.0
      %230 = vmatpush1.msra.mxu0 %v188
      %231 = vmatprep.subr.mxu0 0.0
      %232 = vmatpush1.msra.mxu0 %v187
      %233 = vmatprep.subr.mxu0 0.0
      %234 = vmatpush1.msra.mxu0 %v186
      %235 = vmatprep.subr.mxu0 0.0
      %236 = vmatpush1.msra.mxu0 %v185
      %237 = vmatprep.subr.mxu0 0.0
      %238 = vmatpush1.msra.mxu0 %v184
      %239 = vmatprep.subr.mxu0 0.0
      %240 = vmatpush2.msra.mxu0 0.0
      %241 = vmatprep.subr.mxu0 0.0
      %242 = vmatpush2.msra.mxu0 0.0
      %243 = vmatprep.subr.mxu0 0.0
      %244 = vmatpush2.msra.mxu0 0.0
      %245 = vmatprep.subr.mxu0 0.0
      %246 = vmatpush2.msra.mxu0 0.0
      %247 = vmatprep.subr.mxu0 0.0
      %248 = vmatpush2.msra.mxu0 0.0
      %249 = vmatprep.subr.mxu0 0.0
      %250 = vmatpush2.msra.mxu0 0.0
      %251 = vmatprep.subr.mxu0 0.0
      %252 = vmatpush2.msra.mxu0 0.0
      %253 = vmatprep.subr.mxu0 0.0
      %254 = vmatpush2.msra.mxu0 0.0
      %255 = vmatprep.subr.mxu0 0.0
      %256 = vmatpush2.msra.mxu0 0.0
      %257 = vmatprep.subr.mxu0 0.0
      %258 = vmatpush2.msra.mxu0 0.0
      %259 = vmatprep.subr.mxu0 0.0
      %260 = vmatpush2.msra.mxu0 0.0
      %261 = vmatprep.subr.mxu0 0.0
      %262 = vmatpush2.msra.mxu0 0.0
      %263 = vmatprep.subr.mxu0 0.0
      %264 = vmatpush2.msra.mxu0 0.0
      %265 = vmatprep.subr.mxu0 0.0
      %266 = vmatpush2.msra.mxu0 0.0
      %267 = vmatprep.subr.mxu0 0.0
      %268 = vmatpush2.msra.mxu0 0.0
      %269 = vmatprep.subr.mxu0 0.0
      %270 = vmatpush2.msra.mxu0 0.0
      %271 = vmatprep.mubr.f32.mxu0 0.0
      %272 = vmatmul.mubr.f32.gmra.mxu0 %v183
      %v273 = vpop.f32.mrf.mxu0
      %v274 = vadd.f32 %v205, %v273
      %v275 = vpop.f32.mrf.mxu0
      %276 = vdwg.mxu0
      %v277 = vmax.f32 %v274, 0.0
      %v278 = vld [vmem:[#allocation9] sm:$0xff]
      %v279 = vld [vmem:[#allocation9 + $0x8] sm:$0xff]
      %v280 = vld [vmem:[#allocation9 + $0x10] sm:$0xff]
      %v281 = vld [vmem:[#allocation9 + $0x18] sm:$0xff]
      %v282 = vld [vmem:[#allocation9 + $0x20] sm:$0xff]
      %v283 = vld [vmem:[#allocation9 + $0x28] sm:$0xff]
      %v284 = vld [vmem:[#allocation9 + $0x30] sm:$0xff]
      %v285 = vld [vmem:[#allocation9 + $0x38] sm:$0xff]
      %v286 = vld [vmem:[#allocation9 + $0x40] sm:$0xff]
      %v287 = vld [vmem:[#allocation9 + $0x48] sm:$0xff]
      %v288 = vld [vmem:[#allocation9 + $0x50] sm:$0xff]
      %v289 = vld [vmem:[#allocation9 + $0x58] sm:$0xff]
      %v290 = vld [vmem:[#allocation9 + $0x60] sm:$0xff]
      %v291 = vld [vmem:[#allocation9 + $0x68] sm:$0xff]
      %v292 = vld [vmem:[#allocation9 + $0x70] sm:$0xff]
      %v293 = vld [vmem:[#allocation9 + $0x78] sm:$0xff]
      %v294 = vld [vmem:[%s6] sm:$0x1]
      %v296 = vlaneseq
      %v297 = vshrl.u32 %v296, 7
      %v298 = vsub.s32 0, %v297
      %v299 = vrot.slane %v294, %v298
      %301 = vmatprep.subr.mxu0 0.0
      %302 = vmatpush1.msra.mxu0 %v293
      %303 = vmatprep.subr.mxu0 0.0
      %304 = vmatpush1.msra.mxu0 %v292
      %305 = vmatprep.subr.mxu0 0.0
      %306 = vmatpush1.msra.mxu0 %v291
      %307 = vmatprep.subr.mxu0 0.0
      %308 = vmatpush1.msra.mxu0 %v290
      %309 = vmatprep.subr.mxu0 0.0
      %310 = vmatpush1.msra.mxu0 %v289
      %311 = vmatprep.subr.mxu0 0.0
      %312 = vmatpush1.msra.mxu0 %v288
      %313 = vmatprep.subr.mxu0 0.0
      %314 = vmatpush1.msra.mxu0 %v287
      %315 = vmatprep.subr.mxu0 0.0
      %316 = vmatpush1.msra.mxu0 %v286
      %317 = vmatprep.subr.mxu0 0.0
      %318 = vmatpush1.msra.mxu0 %v285
      %319 = vmatprep.subr.mxu0 0.0
      %320 = vmatpush1.msra.mxu0 %v284
      %321 = vmatprep.subr.mxu0 0.0
      %322 = vmatpush1.msra.mxu0 %v283
      %323 = vmatprep.subr.mxu0 0.0
      %324 = vmatpush1.msra.mxu0 %v282
      %325 = vmatprep.subr.mxu0 0.0
      %326 = vmatpush1.msra.mxu0 %v281
      %327 = vmatprep.subr.mxu0 0.0
      %328 = vmatpush1.msra.mxu0 %v280
      %329 = vmatprep.subr.mxu0 0.0
      %330 = vmatpush1.msra.mxu0 %v279
      %331 = vmatprep.subr.mxu0 0.0
      %332 = vmatpush1.msra.mxu0 %v278
      %333 = vmatprep.subr.mxu0 0.0
      %334 = vmatpush2.msra.mxu0 0.0
      %335 = vmatprep.subr.mxu0 0.0
      %336 = vmatpush2.msra.mxu0 0.0
      %337 = vmatprep.subr.mxu0 0.0
      %338 = vmatpush2.msra.mxu0 0.0
      %339 = vmatprep.subr.mxu0 0.0
      %340 = vmatpush2.msra.mxu0 0.0
      %341 = vmatprep.subr.mxu0 0.0
      %342 = vmatpush2.msra.mxu0 0.0
      %343 = vmatprep.subr.mxu0 0.0
      %344 = vmatpush2.msra.mxu0 0.0
      %345 = vmatprep.subr.mxu0 0.0
      %346 = vmatpush2.msra.mxu0 0.0
      %347 = vmatprep.subr.mxu0 0.0
      %348 = vmatpush2.msra.mxu0 0.0
      %349 = vmatprep.subr.mxu0 0.0
      %350 = vmatpush2.msra.mxu0 0.0
      %351 = vmatprep.subr.mxu0 0.0
      %352 = vmatpush2.msra.mxu0 0.0
      %353 = vmatprep.subr.mxu0 0.0
      %354 = vmatpush2.msra.mxu0 0.0
      %355 = vmatprep.subr.mxu0 0.0
      %356 = vmatpush2.msra.mxu0 0.0
      %357 = vmatprep.subr.mxu0 0.0
      %358 = vmatpush2.msra.mxu0 0.0
      %359 = vmatprep.subr.mxu0 0.0
      %360 = vmatpush2.msra.mxu0 0.0
      %361 = vmatprep.subr.mxu0 0.0
      %362 = vmatpush2.msra.mxu0 0.0
      %363 = vmatprep.subr.mxu0 0.0
      %364 = vmatpush2.msra.mxu0 0.0
      %365 = vmatprep.mubr.f32.mxu0 0.0
      %366 = vmatmul.mubr.f32.gmra.mxu0 %v277
      %v367 = vpop.f32.mrf.mxu0
      %v368 = vadd.f32 %v299, %v367
      %v369 = vpop.f32.mrf.mxu0
      %370 = vdwg.mxu0
      %371 = vst [vmem:[#allocation11] sm:$0xff] %v368
    $region53: #{tpu_custom_call.1} parent=1 // pred_fallthru
      _
    // Predicated region
    $region54: #{tpu_custom_call.1} parent=1 // pred_check
      _
    $region55: #{tpu_custom_call.1} parent=1 // pred_check_branch
      %373 = sbr.rel (0) target = $region57
    $region56: #{tpu_custom_call.1} parent=1 // pred_region
      %s375 = ssub.s32 128, 128
      %376 = vsyncadd [#allocation5], %s375
      %s378 = sshll.u32 [#allocation11], 4
      %s379 = int_to_ptr.vmem [resolvable:$true] %s378
      %381 = dma.vmem_to_hbm [thread:$0]  %s379, 128, %s7, [#allocation5]
    $region57: #{tpu_custom_call.1} parent=1 // pred_fallthru
      _
    // Predicated region
    $region58: #{tpu_custom_call.1} parent=1 // pred_check
      _
    $region59: #{tpu_custom_call.1} parent=1 // pred_check_branch
      %383 = sbr.rel (0) target = $region61
    $region60: #{tpu_custom_call.1} parent=1 // pred_region
      %384 = dma.done [#allocation5], 128
    $region61: #{tpu_custom_call.1} parent=1 // pred_fallthru
      _
    %385 = vsyncpa [#allocation4], 1
    %386 = vsyncpa [#allocation7], 1
    %387 = vsyncpa [#allocation10], 1
    %388 = vsyncpa [#allocation5], 1

</llo_original>
